<compile_context>
chip_gen: v5e
topology: v5e:2x2
jax: 0.10.0
libtpu: 0.0.40
codegen_flags: <defaults>
</compile_context>

<pallas_src>
import jax
import jax.numpy as jnp
from jax.experimental import pallas as pl
from jax.experimental.pallas import tpu as pltpu

LANE = 128


def _fc_sigmoid_kernel(params_ref, x0_ref, x1_ref, o_ref):
    # params_ref: SMEM (3,) f32 = [w0, w1, b]
    w0 = params_ref[0]
    w1 = params_ref[1]
    b = params_ref[2]
    # VPU: 2 scalar*vector mults + 2 adds per element (no MXU involved).
    y = x0_ref[...] * w0 + x1_ref[...] * w1 + b
    # sigmoid(y) = 1 / (1 + exp(-y)); exp + reciprocal both issue on the EUP slot.
    e = jnp.exp(-y)
    o_ref[...] = pl.reciprocal(1.0 + e, approx=True)


def _round_up(a, m):
    return ((a + m - 1) // m) * m


def simple_model_forward(x, weight, bias, *, tile_rows=512):
    """x: (N, 2) f32, weight: (1, 2) f32 (PyTorch layout), bias: (1,) f32 -> (N,) f32."""
    n, in_f = x.shape
    assert in_f == 2, "SimpleModel expects in_features=2"
    x = x.astype(jnp.float32)

    # Lane-dense slab geometry: N -> rows of 128 lanes, rows tiled in multiples of 8.
    rows = pl.cdiv(n, LANE)
    rows8 = _round_up(max(rows, 1), 8)
    tr = _round_up(min(tile_rows, rows8), 8)          # row-tile (>= 8, <= 512 by default)
    rows_pad = _round_up(rows8, tr)
    n_pad = rows_pad * LANE
    grid = (rows_pad // tr,)

    # Two lane-dense feature planes (padding is benign: results are sliced off).
    x0 = jnp.pad(x[:, 0], (0, n_pad - n)).reshape(rows_pad, LANE)
    x1 = jnp.pad(x[:, 1], (0, n_pad - n)).reshape(rows_pad, LANE)

    # [w0, w1, b] as an SMEM scalar table.
    params = jnp.concatenate(
        [weight.reshape(-1).astype(jnp.float32), bias.reshape(-1).astype(jnp.float32)]
    )

    out = pl.pallas_call(
        _fc_sigmoid_kernel,
        out_shape=jax.ShapeDtypeStruct((rows_pad, LANE), jnp.float32),
        grid=grid,
        in_specs=[
            pl.BlockSpec(memory_space=pltpu.MemorySpace.SMEM),     # params (3,) in SMEM
            pl.BlockSpec((tr, LANE), lambda i: (i, 0)),            # x0 plane tile
            pl.BlockSpec((tr, LANE), lambda i: (i, 0)),            # x1 plane tile
        ],
        out_specs=pl.BlockSpec((tr, LANE), lambda i: (i, 0)),      # lane-dense output slab
        compiler_params=pltpu.CompilerParams(
            dimension_semantics=("parallel",),
        ),
        cost_estimate=pl.CostEstimate(
            flops=5 * n_pad,                 # 2 mul + 2 add + 1 add per element
            transcendentals=2 * n_pad,       # exp + reciprocal
            bytes_accessed=12 * n_pad + 12,  # 2 f32 in-planes + 1 f32 out-plane + params
        ),
    )(params, x0, x1)

    # x.view(-1) in the PyTorch module: flatten and drop padding.
    return out.reshape(-1)[:n]


if __name__ == "__main__":
    key = jax.random.PRNGKey(0)
    kx, kw, kb = jax.random.split(key, 3)

    # Small deterministic example consistent with Linear(in_features=2, out_features=1).
    batch = 8
    x = jax.random.normal(kx, (batch, 2), dtype=jnp.float32)

    # PyTorch-style uniform(-1/sqrt(fan_in), 1/sqrt(fan_in)) init.
    bound = 1.0 / jnp.sqrt(2.0)
    weight = jax.random.uniform(kw, (1, 2), minval=-bound, maxval=bound, dtype=jnp.float32)
    bias = jax.random.uniform(kb, (1,), minval=-bound, maxval=bound, dtype=jnp.float32)

    y = simple_model_forward(x, weight, bias)
    jax.block_until_ready(y)

    # Sanity check against plain-JAX reference (tolerance covers approx reciprocal).
    y_ref = jax.nn.sigmoid(x @ weight.T + bias).reshape(-1)
    assert y.shape == (batch,)
    assert jnp.allclose(y, y_ref, atol=2e-3, rtol=1e-3), "mismatch vs reference"

    print("KERNEL_OK")
</pallas_src>

<mosaic_0001>
module attributes {stable_mosaic.version = 11 : i64} {
  func.func @_fc_sigmoid_kernel(%arg0: i32, %arg1: memref<3xf32, #tpu.memory_space<smem>>, %arg2: memref<8x128xf32, #tpu.memory_space<vmem>>, %arg3: memref<8x128xf32, #tpu.memory_space<vmem>>, %arg4: memref<8x128xf32, #tpu.memory_space<vmem>>) attributes {dimension_semantics = [#tpu.dimension_semantics<parallel>], iteration_bounds = array<i64: 1>, scalar_prefetch = 0 : i64, scratch_operands = 0 : i64, tpu.core_type = #tpu.core_type<tc>, window_params = [{transform_indices = @transform_0, window_bounds = array<i64: 3>}, {transform_indices = @transform_1, window_bounds = array<i64: 8, 128>}, {transform_indices = @transform_2, window_bounds = array<i64: 8, 128>}, {transform_indices = @transform_3, window_bounds = array<i64: 8, 128>}]} {
    %c0 = arith.constant 0 : index
    %0 = memref.load %arg1[%c0] : memref<3xf32, #tpu.memory_space<smem>>
    %c1 = arith.constant 1 : index
    %1 = memref.load %arg1[%c1] : memref<3xf32, #tpu.memory_space<smem>>
    %c2 = arith.constant 2 : index
    %2 = memref.load %arg1[%c2] : memref<3xf32, #tpu.memory_space<smem>>
    %c0_0 = arith.constant 0 : index
    %c0_1 = arith.constant 0 : index
    %3 = vector.load %arg2[%c0_0, %c0_1] : memref<8x128xf32, #tpu.memory_space<vmem>>, vector<8x128xf32>
    %4 = vector.broadcast %0 : f32 to vector<8x128xf32>
    %5 = arith.mulf %3, %4 : vector<8x128xf32>
    %c0_2 = arith.constant 0 : index
    %c0_3 = arith.constant 0 : index
    %6 = vector.load %arg3[%c0_2, %c0_3] : memref<8x128xf32, #tpu.memory_space<vmem>>, vector<8x128xf32>
    %7 = vector.broadcast %1 : f32 to vector<8x128xf32>
    %8 = arith.mulf %6, %7 : vector<8x128xf32>
    %9 = arith.addf %5, %8 : vector<8x128xf32>
    %10 = vector.broadcast %2 : f32 to vector<8x128xf32>
    %11 = arith.addf %9, %10 : vector<8x128xf32>
    %cst = arith.constant 0.000000e+00 : f32
    %12 = vector.broadcast %cst : f32 to vector<8x128xf32>
    %13 = arith.subf %12, %11 : vector<8x128xf32>
    %14 = math.exp %13 : vector<8x128xf32>
    %cst_4 = arith.constant 1.000000e+00 : f32
    %15 = vector.broadcast %cst_4 : f32 to vector<8x128xf32>
    %16 = arith.addf %15, %14 : vector<8x128xf32>
    %17 = tpu.reciprocal %16 {approx = true} : vector<8x128xf32> -> vector<8x128xf32>
    %c0_5 = arith.constant 0 : index
    %c0_6 = arith.constant 0 : index
    %18 = vector.load %arg4[%c0_5, %c0_6] : memref<8x128xf32, #tpu.memory_space<vmem>>, vector<8x128xf32>
    tpu.vector_store %arg4[%c0_5, %c0_6], %17 {strides = array<i32>} : memref<8x128xf32, #tpu.memory_space<vmem>>, vector<8x128xf32>,
    return
  }
  func.func @transform_0(%arg0: i32) -> i32 {
    %c0_i32 = arith.constant 0 : i32
    %c0_i32_0 = arith.constant 0 : i32
    return %c0_i32 : i32
  }
  func.func @transform_1(%arg0: i32) -> (i32, i32) {
    %c0_i32 = arith.constant 0 : i32
    %c0_i32_0 = arith.constant 0 : i32
    return %arg0, %c0_i32 : i32, i32
  }
  func.func @transform_2(%arg0: i32) -> (i32, i32) {
    %c0_i32 = arith.constant 0 : i32
    %c0_i32_0 = arith.constant 0 : i32
    return %arg0, %c0_i32 : i32, i32
  }
  func.func @transform_3(%arg0: i32) -> (i32, i32) {
    %c0_i32 = arith.constant 0 : i32
    %c0_i32_0 = arith.constant 0 : i32
    return %arg0, %c0_i32 : i32, i32
  }
}

</mosaic_0001>

<llo_original>
// kernel: tpu_custom_call.1
$region0: #{tpu_custom_call.1}
  #allocation0 [shape = 'u32[]', space=smem, size = 0x4, offset = 0x4, fixed_abs, tag = 'smem constant byte address 0x4 - core index']
  #allocation1 [shape = 'u32[72,128]{1,0:T(1,128)}', space=vmem, size = 0x9000, scoped, tag = 'internal scratch']
  %s0 = inlined_call_operand.hbm [shape: f32[3], index: 0, kind: input, shape index: {}]
  %s1 = inlined_call_operand.hbm [shape: f32[8,128], index: 1, kind: input, shape index: {}]
  %s2 = inlined_call_operand.hbm [shape: f32[8,128], index: 2, kind: input, shape index: {}]
  %s3 = inlined_call_operand.hbm [shape: f32[8,128], index: 3, kind: output, shape index: {}]
  %s4 = sld [smem:[#allocation0]]
  $region34: #{tpu_custom_call.1} parent=0
    _
  %s6 = ssub.s32 1, %s4
  %s7 = scalar_select 0, %s6, %s4
  $region1: #{tpu_custom_call.1} parent=0
    #allocation2 [shape = 'u8[512]{0}', space=smem, size = 0x200, scoped, tag = 'input window, operand 0, single buffered']
    #allocation3 [shape = 's32[1]{0}', space=sflag, size = 0x4, scoped, tag = 'scoped memory for tpu_custom_call.1']
    #allocation4 [shape = 's32[1]{0}', space=sflag, size = 0x4, scoped, tag = 'scoped memory for tpu_custom_call.1']
    #allocation5 [shape = 's32[1]{0}', space=sflag, size = 0x4, scoped, tag = 'scoped memory for tpu_custom_call.1']
    #allocation6 [shape = 'u8[4096]{0}', space=vmem, size = 0x1000, scoped, tag = 'input window, operand 1, single buffered']
    #allocation7 [shape = 'u8[4096]{0}', space=vmem, size = 0x1000, scoped, tag = 'input window, operand 2, single buffered']
    #allocation8 [shape = 's32[1]{0}', space=sflag, size = 0x4, scoped, tag = 'scoped memory for tpu_custom_call.1']
    #allocation9 [shape = 'u8[4096]{0}', space=vmem, size = 0x1000, scoped, tag = 'output window, operand 0, single buffered']
    %8 = vsyncpa [#allocation5], 0
    %9 = vsyncpa [#allocation3], 0
    %10 = vsyncpa [#allocation8], 0
    %11 = vsyncpa [#allocation4], 0
    // Predicated region
    $region2: #{tpu_custom_call.1} parent=1 // pred_check
      _
    $region3: #{tpu_custom_call.1} parent=1 // pred_check_branch
      %13 = sbr.rel (0) target = $region5
    $region4: #{tpu_custom_call.1} parent=1 // pred_region
      %15 = vsyncadd [#allocation5], 0
      %s17 = sshll.u32 %s0, 4
      %s18 = int_to_ptr.hbm [resolvable:$true] %s17
      %20 = dma.hbm_to_smem %s18, 16, [#allocation2], [#allocation5]
    $region5: #{tpu_custom_call.1} parent=1 // pred_fallthru
      _
    // Predicated region
    $region6: #{tpu_custom_call.1} parent=1 // pred_check
      _
    $region7: #{tpu_custom_call.1} parent=1 // pred_check_branch
      %22 = sbr.rel (0) target = $region9
    $region8: #{tpu_custom_call.1} parent=1 // pred_region
      %24 = vsyncadd [#allocation3], 0
      %s26 = sshll.u32 %s1, 4
      %s27 = int_to_ptr.hbm [resolvable:$true] %s26
      %s28 = sshll.u32 [#allocation6], 4
      %s29 = int_to_ptr.vmem [resolvable:$true] %s28
      %31 = dma.hbm_to_vmem [thread:$0]  %s27, 128, %s29, [#allocation3]
    $region9: #{tpu_custom_call.1} parent=1 // pred_fallthru
      _
    // Predicated region
    $region10: #{tpu_custom_call.1} parent=1 // pred_check
      _
    $region11: #{tpu_custom_call.1} parent=1 // pred_check_branch
      %33 = sbr.rel (0) target = $region13
    $region12: #{tpu_custom_call.1} parent=1 // pred_region
      %35 = vsyncadd [#allocation8], 0
      %s37 = sshll.u32 %s2, 4
      %s38 = int_to_ptr.hbm [resolvable:$true] %s37
      %s39 = sshll.u32 [#allocation7], 4
      %s40 = int_to_ptr.vmem [resolvable:$true] %s39
      %42 = dma.hbm_to_vmem [thread:$0]  %s38, 128, %s40, [#allocation8]
    $region13: #{tpu_custom_call.1} parent=1 // pred_fallthru
      _
    // Predicated region
    $region14: #{tpu_custom_call.1} parent=1 // pred_check
      _
    $region15: #{tpu_custom_call.1} parent=1 // pred_check_branch
      %44 = sbr.rel (0) target = $region17
    $region16: #{tpu_custom_call.1} parent=1 // pred_region
      %46 = dma.done [#allocation5], 16
    $region17: #{tpu_custom_call.1} parent=1 // pred_fallthru
      _
    // Predicated region
    $region18: #{tpu_custom_call.1} parent=1 // pred_check
      _
    $region19: #{tpu_custom_call.1} parent=1 // pred_check_branch
      %48 = sbr.rel (0) target = $region21
    $region20: #{tpu_custom_call.1} parent=1 // pred_region
      %50 = dma.done [#allocation3], 128
    $region21: #{tpu_custom_call.1} parent=1 // pred_fallthru
      _
    // Predicated region
    $region22: #{tpu_custom_call.1} parent=1 // pred_check
      _
    $region23: #{tpu_custom_call.1} parent=1 // pred_check_branch
      %52 = sbr.rel (0) target = $region25
    $region24: #{tpu_custom_call.1} parent=1 // pred_region
      %54 = dma.done [#allocation8], 128
    $region25: #{tpu_custom_call.1} parent=1 // pred_fallthru
      _
    %55 = sfence
    %s56 = sld [smem:[#allocation2]]
    %s57 = sld [smem:[#allocation2 + $0x1]]
    %s58 = sld [smem:[#allocation2 + $0x2]]
    %v59 = vld [vmem:[#allocation6] sm:$0xff]
    %v60 = vstv %s56
    %v61 = vmul.f32 %v59, %v60
    %v62 = vld [vmem:[#allocation7] sm:$0xff]
    %v63 = vstv %s57
    %v64 = vmul.f32 %v62, %v63
    %v65 = vadd.f32 %v61, %v64
    %v66 = vstv %s58
    %v67 = vadd.f32 %v65, %v66
    %v68 = vsub.f32 0.0, %v67
    %v69 = vmul.f32 %v68, 1.442695
    %v70 = vpow.pop %v69
    %v71 = vadd.f32 %v70, 1.0
    %v72 = vrcp.pop %v71
    %73 = vst [vmem:[#allocation9] sm:$0xff] %v72
    // Predicated region
    $region26: #{tpu_custom_call.1} parent=1 // pred_check
      _
    $region27: #{tpu_custom_call.1} parent=1 // pred_check_branch
      %75 = sbr.rel (0) target = $region29
    $region28: #{tpu_custom_call.1} parent=1 // pred_region
      %77 = vsyncadd [#allocation4], 0
      %s79 = sshll.u32 [#allocation9], 4
      %s80 = int_to_ptr.vmem [resolvable:$true] %s79
      %s81 = sshll.u32 %s3, 4
      %s82 = int_to_ptr.hbm [resolvable:$true] %s81
      %84 = dma.vmem_to_hbm [thread:$0]  %s80, 128, %s82, [#allocation4]
    $region29: #{tpu_custom_call.1} parent=1 // pred_fallthru
      _
    // Predicated region
    $region30: #{tpu_custom_call.1} parent=1 // pred_check
      _
    $region31: #{tpu_custom_call.1} parent=1 // pred_check_branch
      %86 = sbr.rel (0) target = $region33
    $region32: #{tpu_custom_call.1} parent=1 // pred_region
      %88 = dma.done [#allocation4], 128
    $region33: #{tpu_custom_call.1} parent=1 // pred_fallthru
      _
    %89 = vsyncpa [#allocation3], 1
    %90 = vsyncpa [#allocation8], 1
    %91 = vsyncpa [#allocation4], 1
    %92 = vsyncpa [#allocation5], 1

</llo_original>
